<compile_context>
chip_gen: v7x
topology: tpu7x:2x2x1
jax: 0.10.0
libtpu: 0.0.40
codegen_flags: <defaults>
</compile_context>

<pallas_src>
import functools

import jax
import jax.numpy as jnp
from jax.experimental import pallas as pl
from jax.experimental.pallas import tpu as pltpu


def _round_up(x, m):
    return ((x + m - 1) // m) * m


def _patch_embed_kernel(x_ref, w_ref, b_ref, o_ref):
    # One (TM, K) x (K, E) MXU GEMM with f32 accumulation + f32 bias add.
    acc = jnp.dot(x_ref[...], w_ref[...], preferred_element_type=jnp.float32)
    o_ref[...] = (acc + b_ref[...]).astype(o_ref.dtype)


@functools.partial(jax.jit,
                   static_argnames=("patch_size", "compute_dtype", "out_dtype",
                                    "tile_m"))
def patch_embedding(x, weight, bias, patch_size, *,
                    compute_dtype=jnp.bfloat16, out_dtype=None, tile_m=None):
    """x: (B, C, H, W) NCHW (matching PyTorch).
    weight: (E, C, p, p) (PyTorch Conv2d layout).  bias: (E,).
    returns (B, N, E) with N = (H/p)*(W/p).
    """
    B, C, H, W = x.shape
    E = weight.shape[0]
    p = patch_size
    Hp, Wp = H // p, W // p
    N = Hp * Wp
    K = C * p * p
    M = B * N
    out_dtype = x.dtype if out_dtype is None else out_dtype
    in_it = jnp.dtype(compute_dtype).itemsize
    out_it = jnp.dtype(out_dtype).itemsize

    # --- glue: cast first (halves transpose bytes on bf16), then extract
    # non-overlapping patches row-major over (Hp, Wp):
    # (B,C,Hp,p,Wp,p) -> (B,Hp,Wp,C,p,p) -> (M, K)
    # TODO(synk): this 6-D transpose still writes one extra lhs copy to HBM;
    # keep activations NHWC upstream (pure reshape) or fuse the extraction into
    # the kernel / CompilerParams(allow_input_fusion=...) to remove it entirely.
    xc = x.astype(compute_dtype)
    patches = xc.reshape(B, C, Hp, p, Wp, p).transpose(0, 2, 4, 1, 3, 5).reshape(M, K)

    # rhs: (E, C, p, p) -> (K, E), K ordered (C, ph, pw) to match the lhs.
    w_flat = weight.reshape(E, K).T.astype(compute_dtype)

    # Lane padding: K/E -> 128 multiples (zero pad: padded K cols contribute 0,
    # padded E cols are sliced off).  M is NOT padded — grid = cdiv(M, TM) and
    # Pallas masks the ragged final block (OOB output rows are dropped).
    K_pad = _round_up(K, 128)
    E_pad = _round_up(E, 128)
    if K_pad != K:
        patches = jnp.pad(patches, ((0, 0), (0, K_pad - K)))
    w_p = jnp.pad(w_flat, ((0, K_pad - K), (0, E_pad - E)))
    b_row = jnp.pad(bias.astype(jnp.float32), (0, E_pad - E)).reshape(1, E_pad)

    # --- M tiling: sublane-aligned per dtype; >= 2 grid steps when possible so
    # both v7x TensorCores get work (near-neutral on single-TC v5e/v6e).
    align = 16 if in_it == 2 else 8
    if tile_m is None:
        tile_m = 1024 if in_it == 2 else 512
    if M <= align:
        TM = M                                    # full-dim block is always legal
    else:
        TM = min(_round_up(tile_m, align), _round_up(M, align))
        if pl.cdiv(M, TM) < 2:
            TM = _round_up(pl.cdiv(M, 2), align)
    grid_m = pl.cdiv(M, TM)

    cost = pl.CostEstimate(
        flops=2 * M * K_pad * E_pad,
        transcendentals=0,
        bytes_accessed=(M * K_pad + K_pad * E_pad) * in_it
                       + M * E_pad * out_it + E_pad * 4,
    )

    # VMEM budget: double-buffered lhs/out blocks + resident rhs/bias + headroom,
    # clamped to [16 MiB, 64 MiB] (valid on every generation incl. v7x).
    vmem_bytes = (2 * TM * K_pad * in_it + 2 * TM * E_pad * out_it
                  + 2 * K_pad * E_pad * in_it + 2 * E_pad * 4)
    vmem_limit = min(max(int(vmem_bytes * 1.5) + (4 << 20), 16 << 20), 64 << 20)

    # TODO(synk): on v7x, single-buffer the grid-invariant rhs/bias blocks
    # (pipeline_mode=pl.Buffered(1)) and add an E grid axis once
    # 2*K_pad*E_pad*itemsize approaches ~20 MiB.
    out = pl.pallas_call(
        _patch_embed_kernel,
        out_shape=jax.ShapeDtypeStruct((M, E_pad), out_dtype),
        grid_spec=pl.GridSpec(
            grid=(grid_m,),
            in_specs=[
                pl.BlockSpec((TM, K_pad), lambda i: (i, 0)),      # lhs: tiled over M
                pl.BlockSpec((K_pad, E_pad), lambda i: (0, 0)),   # rhs: VMEM-resident
                pl.BlockSpec((1, E_pad), lambda i: (0, 0)),       # bias: resident
            ],
            out_specs=pl.BlockSpec((TM, E_pad), lambda i: (i, 0)),
        ),
        compiler_params=pltpu.CompilerParams(
            dimension_semantics=("parallel",),
            vmem_limit_bytes=vmem_limit),
        cost_estimate=cost,
    )(patches, w_p, b_row)

    if E_pad != E:
        out = out[:, :E]
    return out.reshape(B, N, E)


def init_params(key, patch_size, in_channels, embed_dim):
    """Deterministic init mirroring the PyTorch module:
    - weight: xavier_uniform_ on Conv2d weight (E, C, p, p)
    - bias:   PyTorch Conv2d default uniform(-1/sqrt(fan_in), 1/sqrt(fan_in))
    """
    kw, kb = jax.random.split(key)
    p = patch_size
    fan_in = in_channels * p * p
    fan_out = embed_dim * p * p
    bound_w = (6.0 / (fan_in + fan_out)) ** 0.5
    weight = jax.random.uniform(
        kw, (embed_dim, in_channels, p, p), jnp.float32,
        minval=-bound_w, maxval=bound_w)
    bound_b = 1.0 / (fan_in ** 0.5)
    bias = jax.random.uniform(
        kb, (embed_dim,), jnp.float32, minval=-bound_b, maxval=bound_b)
    return weight, bias


if __name__ == "__main__":
    # Small shapes consistent with the module's forward.
    B, C, H, W = 2, 4, 16, 16
    patch_size = 4
    embed_dim = 32

    key = jax.random.PRNGKey(0)
    kx, kp = jax.random.split(key)
    x = jax.random.normal(kx, (B, C, H, W), jnp.float32)
    weight, bias = init_params(kp, patch_size, C, embed_dim)

    # Pure-JAX reference (lax conv, NCHW like PyTorch) + flatten(2).transpose(1,2).
    ref = jax.lax.conv_general_dilated(
        x, weight, window_strides=(patch_size, patch_size), padding="VALID",
        dimension_numbers=("NCHW", "OIHW", "NCHW"))
    ref = ref + bias[None, :, None, None]
    ref = ref.reshape(B, embed_dim, -1).transpose(0, 2, 1)

    # f32 operand path (strict check, matches PyTorch numerics).
    out_f32 = patch_embedding(x, weight, bias, patch_size,
                              compute_dtype=jnp.float32)
    out_f32 = jax.block_until_ready(out_f32)
    assert out_f32.shape == (B, (H // patch_size) * (W // patch_size), embed_dim)
    assert jnp.allclose(out_f32, ref, atol=1e-5, rtol=1e-5)

    # Default path: bf16 operands (MXU-native), f32 accumulate, f32 output.
    out_bf16 = patch_embedding(x, weight, bias, patch_size)
    out_bf16 = jax.block_until_ready(out_bf16)
    assert out_bf16.shape == out_f32.shape
    assert jnp.allclose(out_bf16, ref, atol=5e-2, rtol=5e-2)

    print("KERNEL_OK")
</pallas_src>

<mosaic_0001>
module attributes {stable_mosaic.version = 11 : i64} {
  func.func @_patch_embed_kernel(%arg0: i32, %arg1: memref<16x128xf32, #tpu.memory_space<vmem>>, %arg2: memref<128x128xf32, #tpu.memory_space<vmem>>, %arg3: memref<1x128xf32, #tpu.memory_space<vmem>>, %arg4: memref<16x128xf32, #tpu.memory_space<vmem>>) attributes {dimension_semantics = [#tpu.dimension_semantics<parallel>], iteration_bounds = array<i64: 2>, scalar_prefetch = 0 : i64, scratch_operands = 0 : i64, tpu.core_type = #tpu.core_type<tc>, window_params = [{transform_indices = @transform_0, window_bounds = array<i64: 16, 128>}, {pipeline_mode = #tpu.pipeline_mode<synchronous>, transform_indices = @transform_1, window_bounds = array<i64: 128, 128>}, {pipeline_mode = #tpu.pipeline_mode<synchronous>, transform_indices = @transform_2, window_bounds = array<i64: 1, 128>}, {transform_indices = @transform_3, window_bounds = array<i64: 16, 128>}]} {
    %c0 = arith.constant 0 : index
    %c0_0 = arith.constant 0 : index
    %0 = vector.load %arg1[%c0, %c0_0] : memref<16x128xf32, #tpu.memory_space<vmem>>, vector<16x128xf32>
    %c0_1 = arith.constant 0 : index
    %c0_2 = arith.constant 0 : index
    %1 = vector.load %arg2[%c0_1, %c0_2] : memref<128x128xf32, #tpu.memory_space<vmem>>, vector<128x128xf32>
    %cst = arith.constant dense<0.000000e+00> : vector<16x128xf32>
    %2 = tpu.matmul %0, %1, %cst {dimension_numbers = #tpu.dot_dimension_numbers<[1], [0], [0], [1], [0, 0, 1, 1], [], []>} : vector<16x128xf32>, vector<128x128xf32>, vector<16x128xf32> -> vector<16x128xf32>
    %c0_3 = arith.constant 0 : index
    %c0_4 = arith.constant 0 : index
    %3 = vector.load %arg3[%c0_3, %c0_4] : memref<1x128xf32, #tpu.memory_space<vmem>>, vector<1x128xf32>
    %4 = vector.broadcast %3 : vector<1x128xf32> to vector<16x128xf32>
    %5 = arith.addf %2, %4 : vector<16x128xf32>
    %c0_5 = arith.constant 0 : index
    %c0_6 = arith.constant 0 : index
    %6 = vector.load %arg4[%c0_5, %c0_6] : memref<16x128xf32, #tpu.memory_space<vmem>>, vector<16x128xf32>
    tpu.vector_store %arg4[%c0_5, %c0_6], %5 {strides = array<i32>} : memref<16x128xf32, #tpu.memory_space<vmem>>, vector<16x128xf32>,
    return
  }
  func.func @transform_0(%arg0: i32) -> (i32, i32) {
    %c0_i32 = arith.constant 0 : i32
    %c0_i32_0 = arith.constant 0 : i32
    return %arg0, %c0_i32 : i32, i32
  }
  func.func @transform_1(%arg0: i32) -> (i32, i32) {
    %c0_i32 = arith.constant 0 : i32
    %c0_i32_0 = arith.constant 0 : i32
    %c0_i32_1 = arith.constant 0 : i32
    return %c0_i32, %c0_i32_0 : i32, i32
  }
  func.func @transform_2(%arg0: i32) -> (i32, i32) {
    %c0_i32 = arith.constant 0 : i32
    %c0_i32_0 = arith.constant 0 : i32
    %c0_i32_1 = arith.constant 0 : i32
    return %c0_i32, %c0_i32_0 : i32, i32
  }
  func.func @transform_3(%arg0: i32) -> (i32, i32) {
    %c0_i32 = arith.constant 0 : i32
    %c0_i32_0 = arith.constant 0 : i32
    return %arg0, %c0_i32 : i32, i32
  }
}

</mosaic_0001>

<llo_original>
// kernel: patch_embedding.1
$region0: #{patch_embedding.1}
  #allocation0 [shape = 'u32[]', space=smem, size = 0x4, offset = 0x4, fixed_abs, tag = 'smem constant byte address 0x4 - core index']
  #allocation1 [shape = 'u32[144,128]{1,0:T(1,128)}', space=vmem, size = 0x12000, scoped, tag = 'internal scratch']
  %s0 = inlined_call_operand.vmem [shape: f32[32,128], index: 0, kind: input, shape index: {}]
  %s1 = inlined_call_operand.vmem [shape: f32[128,128], index: 1, kind: input, shape index: {}]
  %s2 = inlined_call_operand.vmem [shape: f32[1,128], index: 2, kind: input, shape index: {}]
  %s3 = inlined_call_operand.hbm [shape: f32[32,128], index: 3, kind: output, shape index: {}]
  %s4 = sld [smem:[#allocation0]]
  $region45: #{patch_embedding.1} parent=0
    _
  %s6 = ssub.s32 1, %s4
  %s7 = scalar_select 0, %s6, %s4
  $region1: #{patch_embedding.1} parent=0
    #allocation2 [shape = 'u8[16384]{0}', space=vmem, size = 0x4000, scoped, tag = 'output window, operand 0']
    #allocation3 [shape = 's32[2]{0}', space=sflag, size = 0x8, scoped, tag = 'scoped memory for patch_embedding.1']
    %8 = vsyncpa [#allocation3], 0
    %s9 = scalar_lea.sflag [#allocation3], 1
    %10 = vsyncpa %s9, 0
    loop: start=0, step=1, limit=4
    $region2: #{patch_embedding.1} parent=1 // loop_pre_header
      _
    $region3: #{patch_embedding.1} parent=1 // loop_header
      %s12 = sphi 0, %s16
      %p13 = scmp.ge.s32.totalorder %s12, 4
      %s22 = sphi 0, %s24
      %s25 = sphi 0, %s22
      %s26 = sphi 0, %s25
      %s42 = sphi 0, %s26
      %s46 = sphi 0, %s46
      %s48 = sphi 0, %s46
      %s49 = sphi 0, %s48
      %s63 = sphi 0, %s49
      %s67 = sphi 0, %s67
      %s69 = sphi 0, %s67
      %s70 = sphi 0, %s69
      %s84 = sphi 0, %s70
      %s90 = sphi 0, %s92
      %s93 = sphi 0, %s90
      %s94 = sphi 0, %s93
      %s110 = sphi 0, %s94
    $region4: #{patch_embedding.1} parent=1 // loop_header_branch
      %15 = sbr.rel (%p13) target = $region8
    $region5: #{patch_embedding.1} parent=1 // loop_body
      %s17 = ssub.s32 %s12, 1
      %s18 = ssub.s32 %s12, 2
      %s19 = sadd.s32 %s12, 1
      %s20 = ssub.s32 %s12, %s19
      %p21 = scmp.eq.s32.totalorder %s20, 0
      %s23 = sadd.s32 %s22, 1
      %s24 = scalar_select %p21, %s22, %s23
      %p27 = pneg %p21
      %p28 = scmp.eq.s32.totalorder %s12, 1
      %p29 = por %p27, %p28
      %p30 = scmp.ne.s32.totalorder %s22, %s25
      %p31 = scmp.eq.s32.totalorder %s12, 0
      %p32 = por %p30, %p31
      %p33 = scmp.ne.s32.totalorder %s22, %s25
      %p34 = scmp.eq.s32.totalorder %s17, 1
      %p35 = por %p33, %p34
      %p36 = scmp.ne.s32.totalorder %s25, %s26
      %p37 = scmp.eq.s32.totalorder %s17, 0
      %p38 = por %p36, %p37
      %p39 = scmp.ne.s32.totalorder %s25, %s26
      %p40 = scmp.eq.s32.totalorder %s18, 1
      %p41 = por %p39, %p40
      %p43 = scmp.ne.s32.totalorder %s26, %s42
      %p44 = scmp.eq.s32.totalorder %s18, 0
      %p45 = por %p43, %p44
      %s47 = sadd.s32 %s46, 1
      %p50 = scmp.eq.s32.totalorder %s12, 1
      %p51 = scmp.ne.s32.totalorder %s46, %s48
      %p52 = scmp.eq.s32.totalorder %s12, 0
      %p53 = por %p51, %p52
      %p54 = scmp.ne.s32.totalorder %s46, %s48
      %p55 = scmp.eq.s32.totalorder %s17, 1
      %p56 = por %p54, %p55
      %p57 = scmp.ne.s32.totalorder %s48, %s49
      %p58 = scmp.eq.s32.totalorder %s17, 0
      %p59 = por %p57, %p58
      %p60 = scmp.ne.s32.totalorder %s48, %s49
      %p61 = scmp.eq.s32.totalorder %s18, 1
      %p62 = por %p60, %p61
      %p64 = scmp.ne.s32.totalorder %s49, %s63
      %p65 = scmp.eq.s32.totalorder %s18, 0
      %p66 = por %p64, %p65
      %s68 = sadd.s32 %s67, 1
      %p71 = scmp.eq.s32.totalorder %s12, 1
      %p72 = scmp.ne.s32.totalorder %s67, %s69
      %p73 = scmp.eq.s32.totalorder %s12, 0
      %p74 = por %p72, %p73
      %p75 = scmp.ne.s32.totalorder %s67, %s69
      %p76 = scmp.eq.s32.totalorder %s17, 1
      %p77 = por %p75, %p76
      %p78 = scmp.ne.s32.totalorder %s69, %s70
      %p79 = scmp.eq.s32.totalorder %s17, 0
      %p80 = por %p78, %p79
      %p81 = scmp.ne.s32.totalorder %s69, %s70
      %p82 = scmp.eq.s32.totalorder %s18, 1
      %p83 = por %p81, %p82
      %p85 = scmp.ne.s32.totalorder %s70, %s84
      %p86 = scmp.eq.s32.totalorder %s18, 0
      %p87 = por %p85, %p86
      %s88 = ssub.s32 %s12, %s19
      %p89 = scmp.eq.s32.totalorder %s88, 0
      %s91 = sadd.s32 %s90, 1
      %s92 = scalar_select %p89, %s90, %s91
      %p95 = pneg %p89
      %p96 = scmp.eq.s32.totalorder %s12, 1
      %p97 = por %p95, %p96
      %p98 = scmp.ne.s32.totalorder %s90, %s93
      %p99 = scmp.eq.s32.totalorder %s12, 0
      %p100 = por %p98, %p99
      %p101 = scmp.ne.s32.totalorder %s90, %s93
      %p102 = scmp.eq.s32.totalorder %s17, 1
      %p103 = por %p101, %p102
      %p104 = scmp.ne.s32.totalorder %s93, %s94
      %p105 = scmp.eq.s32.totalorder %s17, 0
      %p106 = por %p104, %p105
      %p107 = scmp.ne.s32.totalorder %s93, %s94
      %p108 = scmp.eq.s32.totalorder %s18, 1
      %p109 = por %p107, %p108
      %p111 = scmp.ne.s32.totalorder %s94, %s110
      %p112 = scmp.eq.s32.totalorder %s18, 0
      %p113 = por %p111, %p112
      %p114 = scmp.le.s32.totalorder 1, %s12
      %p115 = scmp.lt.s32.totalorder %s12, 3
      %p116 = pnand %p114, %p115
      %p117 = pneg %p116
      // Predicated region
      $region9: #{patch_embedding.1} parent=5 // pred_check
        _
      $region10: #{patch_embedding.1} parent=5 // pred_check_branch
        %119 = sbr.rel (%p116) target = $region12
      $region11: #{patch_embedding.1} parent=5 // pred_region
        %s120 = ssub.s32 %s12, 1
        // Predicated region
        $region13: #{patch_embedding.1} parent=11 // pred_check
          %p121 = pneg %p59
        $region14: #{patch_embedding.1} parent=11 // pred_check_branch
          %123 = sbr.rel (%p121) target = $region16
        $region15: #{patch_embedding.1} parent=11 // pred_region
          _
        $region16: #{patch_embedding.1} parent=11 // pred_fallthru
          _
        // Predicated region
        $region17: #{patch_embedding.1} parent=11 // pred_check
          %p124 = pneg %p80
        $region18: #{patch_embedding.1} parent=11 // pred_check_branch
          %126 = sbr.rel (%p124) target = $region20
        $region19: #{patch_embedding.1} parent=11 // pred_region
          _
        $region20: #{patch_embedding.1} parent=11 // pred_fallthru
          _
      $region12: #{patch_embedding.1} parent=5 // pred_fallthru
        _
      %p127 = scmp.lt.s32.totalorder %s12, 2
      // Predicated region
      $region21: #{patch_embedding.1} parent=5 // pred_check
        %p128 = pneg %p127
      $region22: #{patch_embedding.1} parent=5 // pred_check_branch
        %130 = sbr.rel (%p128) target = $region24
      $region23: #{patch_embedding.1} parent=5 // pred_region
        // Predicated region
        $region25: #{patch_embedding.1} parent=23 // pred_check
          %p131 = pneg %p32
        $region26: #{patch_embedding.1} parent=23 // pred_check_branch
          %133 = sbr.rel (%p131) target = $region28
        $region27: #{patch_embedding.1} parent=23 // pred_region
          %s134 = smul.u32 2, %s12
          %p135 = scmp.lt.s32.totalorder %s134, 3
          %s136 = scalar_select %p135, %s134, 3
          %s137 = smul.addr %s136, 8
          %s138 = scalar_lea.vmem %s0, %s137
          %s139 = smul.u32 2, %s12
        $region28: #{patch_embedding.1} parent=23 // pred_fallthru
          _
      $region24: #{patch_embedding.1} parent=5 // pred_fallthru
        _
      %p140 = scmp.le.s32.totalorder 1, %s12
      %p141 = scmp.lt.s32.totalorder %s12, 3
      %p142 = pnand %p140, %p141
      %p143 = pneg %p142
      // Predicated region
      $region29: #{patch_embedding.1} parent=5 // pred_check
        _
      $region30: #{patch_embedding.1} parent=5 // pred_check_branch
        %145 = sbr.rel (%p142) target = $region32
      $region31: #{patch_embedding.1} parent=5 // pred_region
        %s146 = ssub.s32 %s12, 1
        %s147 = smul.u32 2, %s17
        %p148 = scmp.lt.s32.totalorder %s147, 3
        %s149 = scalar_select %p148, %s147, 3
        %s150 = smul.addr %s149, 8
        %s151 = scalar_lea.vmem %s0, %s150
        %p152 = pneg %p38
        %p153 = pneg %p35
        %p154 = pneg %p59
        %p155 = pneg %p56
        %p156 = pneg %p80
        %p157 = pneg %p77
        %p158 = pneg %p106
        %p159 = pneg %p103
        %s160 = sand.u32 %s93, 1
        %s161 = scalar_lea.sflag [#allocation3], %s160
        %s162 = sand.u32 %s93, 1
        %s163 = smul.addr %s162, 16
        %s164 = scalar_lea.vmem [#allocation2], %s163
        %s165 = smul.u32 2, %s17
        %p166 = scmp.lt.s32.totalorder %s165, 3
        %s167 = scalar_select %p166, %s165, 3
        %s168 = smul.addr %s167, 8
        %s169 = scalar_lea.vmem %s0, %s168
        %s170 = smul.u32 2, %s17
        %s171 = smul.u32 2, %s17
        %v172 = vld [vmem:[%s169] sm:$0xff]
        %v173 = vld [vmem:[%s169 + $0x8] sm:$0xff]
        %v174 = vld [vmem:[%s1] sm:$0xff]
        %v175 = vld [vmem:[%s1 + $0x8] sm:$0xff]
        %v176 = vld [vmem:[%s1 + $0x10] sm:$0xff]
        %v177 = vld [vmem:[%s1 + $0x18] sm:$0xff]
        %v178 = vld [vmem:[%s1 + $0x20] sm:$0xff]
        %v179 = vld [vmem:[%s1 + $0x28] sm:$0xff]
        %v180 = vld [vmem:[%s1 + $0x30] sm:$0xff]
        %v181 = vld [vmem:[%s1 + $0x38] sm:$0xff]
        %v182 = vld [vmem:[%s1 + $0x40] sm:$0xff]
        %v183 = vld [vmem:[%s1 + $0x48] sm:$0xff]
        %v184 = vld [vmem:[%s1 + $0x50] sm:$0xff]
        %v185 = vld [vmem:[%s1 + $0x58] sm:$0xff]
        %v186 = vld [vmem:[%s1 + $0x60] sm:$0xff]
        %v187 = vld [vmem:[%s1 + $0x68] sm:$0xff]
        %v188 = vld [vmem:[%s1 + $0x70] sm:$0xff]
        %v189 = vld [vmem:[%s1 + $0x78] sm:$0xff]
        %v190 = vld [vmem:[%s2] sm:$0x1]
        %v192 = vlaneseq
        %v193 = vshrl.u32 %v192, 7
        %v194 = vsub.s32 0, %v193
        %v195 = vrot.slane %v190, %v194
        %197 = vmatprep.subr.mxu0 0.0
        %198 = vmatpush1.msra.mxu0 %v174
        %199 = vmatprep.subr.mxu0 0.0
        %200 = vmatpush1.msra.mxu0 %v175
        %201 = vmatprep.subr.mxu0 0.0
        %202 = vmatpush1.msra.mxu0 %v176
        %203 = vmatprep.subr.mxu0 0.0
        %204 = vmatpush1.msra.mxu0 %v177
        %205 = vmatprep.subr.mxu0 0.0
        %206 = vmatpush1.msra.mxu0 %v178
        %207 = vmatprep.subr.mxu0 0.0
        %208 = vmatpush1.msra.mxu0 %v179
        %209 = vmatprep.subr.mxu0 0.0
        %210 = vmatpush1.msra.mxu0 %v180
        %211 = vmatprep.subr.mxu0 0.0
        %212 = vmatpush1.msra.mxu0 %v181
        %213 = vmatprep.subr.mxu0 0.0
        %214 = vmatpush1.msra.mxu0 %v182
        %215 = vmatprep.subr.mxu0 0.0
        %216 = vmatpush1.msra.mxu0 %v183
        %217 = vmatprep.subr.mxu0 0.0
        %218 = vmatpush1.msra.mxu0 %v184
        %219 = vmatprep.subr.mxu0 0.0
        %220 = vmatpush1.msra.mxu0 %v185
        %221 = vmatprep.subr.mxu0 0.0
        %222 = vmatpush1.msra.mxu0 %v186
        %223 = vmatprep.subr.mxu0 0.0
        %224 = vmatpush1.msra.mxu0 %v187
        %225 = vmatprep.subr.mxu0 0.0
        %226 = vmatpush1.msra.mxu0 %v188
        %227 = vmatprep.subr.mxu0 0.0
        %228 = vmatpush1.msra.mxu0 %v189
        %229 = vmatprep.subr.mxu0 0.0
        %230 = vmatpush1.msra.mxu0 0.0
        %231 = vmatprep.subr.mxu0 0.0
        %232 = vmatpush1.msra.mxu0 0.0
        %233 = vmatprep.subr.mxu0 0.0
        %234 = vmatpush1.msra.mxu0 0.0
        %235 = vmatprep.subr.mxu0 0.0
        %236 = vmatpush1.msra.mxu0 0.0
        %237 = vmatprep.subr.mxu0 0.0
        %238 = vmatpush1.msra.mxu0 0.0
        %239 = vmatprep.subr.mxu0 0.0
        %240 = vmatpush1.msra.mxu0 0.0
        %241 = vmatprep.subr.mxu0 0.0
        %242 = vmatpush1.msra.mxu0 0.0
        %243 = vmatprep.subr.mxu0 0.0
        %244 = vmatpush1.msra.mxu0 0.0
        %245 = vmatprep.subr.mxu0 0.0
        %246 = vmatpush1.msra.mxu0 0.0
        %247 = vmatprep.subr.mxu0 0.0
        %248 = vmatpush1.msra.mxu0 0.0
        %249 = vmatprep.subr.mxu0 0.0
        %250 = vmatpush1.msra.mxu0 0.0
        %251 = vmatprep.subr.mxu0 0.0
        %252 = vmatpush1.msra.mxu0 0.0
        %253 = vmatprep.subr.mxu0 0.0
        %254 = vmatpush1.msra.mxu0 0.0
        %255 = vmatprep.subr.mxu0 0.0
        %256 = vmatpush1.msra.mxu0 0.0
        %257 = vmatprep.subr.mxu0 0.0
        %258 = vmatpush1.msra.mxu0 0.0
        %259 = vmatprep.subr.mxu0 0.0
        %260 = vmatpush1.msra.mxu0 0.0
        %261 = vmatprep.mubr.f32.mxu0 0.0
        %262 = vmatmul.mubr.f32.gmra.mrb[0].mxu0 %v172
        %v263 = vpop.f32.mrb[0].mxu0
        %v264 = vadd.f32 %v195, %v263
        %v265 = vpop.f32.mrb[0].mxu0
        %266 = vmatprep.mubr.f32.mxu0 0.0
        %267 = vmatmul.mubr.f32.gmra.mrb[0].mxu0 %v173
        %v268 = vpop.f32.mrb[0].mxu0
        %v269 = vadd.f32 %v195, %v268
        %v270 = vpop.f32.mrb[0].mxu0
        %271 = vdwg.mxu0
        %272 = vst [vmem:[%s164] sm:$0xff] %v264
        %273 = vst [vmem:[%s164 + $0x8] sm:$0xff] %v269
        %s274 = sand.u32 %s93, 1
        %s275 = scalar_lea.sflag [#allocation3], %s274
        %s276 = sand.u32 %s93, 1
        %s277 = smul.addr %s276, 16
        %s278 = scalar_lea.vmem [#allocation2], %s277
        // Predicated region
        $region33: #{patch_embedding.1} parent=31 // pred_check
          %p279 = pneg %p103
        $region34: #{patch_embedding.1} parent=31 // pred_check_branch
          %281 = sbr.rel (%p279) target = $region36
        $region35: #{patch_embedding.1} parent=31 // pred_region
          %s282 = smul.u32 2, %s17
          %s284 = ssub.s32 256, 256
          %285 = vsyncadd %s275, %s284
          %s286 = smul.addr %s282, 128
          %s287 = scalar_lea.hbm %s3, %s286
          %s288 = sshll.u32 %s278, 4
          %s289 = int_to_ptr.vmem [resolvable:$true] %s288
          %294 = dma.vmem_to_hbm [thread:$0]  %s289, 256, %s287, %s275, 128, 128, 8
        $region36: #{patch_embedding.1} parent=31 // pred_fallthru
          _
      $region32: #{patch_embedding.1} parent=5 // pred_fallthru
        _
      %p295 = scmp.le.s32.totalorder 2, %s12
      // Predicated region
      $region37: #{patch_embedding.1} parent=5 // pred_check
        %p296 = pneg %p295
      $region38: #{patch_embedding.1} parent=5 // pred_check_branch
        %298 = sbr.rel (%p296) target = $region40
      $region39: #{patch_embedding.1} parent=5 // pred_region
        %s299 = ssub.s32 %s12, 2
        // Predicated region
        $region41: #{patch_embedding.1} parent=39 // pred_check
          %p300 = pneg %p109
        $region42: #{patch_embedding.1} parent=39 // pred_check_branch
          %302 = sbr.rel (%p300) target = $region44
        $region43: #{patch_embedding.1} parent=39 // pred_region
          %s303 = sand.u32 %s94, 1
          %s304 = scalar_lea.sflag [#allocation3], %s303
          %s305 = sand.u32 %s94, 1
          %s306 = smul.addr %s305, 16
          %s307 = scalar_lea.vmem [#allocation2], %s306
          %308 = dma.done %s304, 256
        $region44: #{patch_embedding.1} parent=39 // pred_fallthru
          _
      $region40: #{patch_embedding.1} parent=5 // pred_fallthru
        _
    $region6: #{patch_embedding.1} parent=1 // loop_footer
      %s16 = sadd.s32 1, %s12
    $region7: #{patch_embedding.1} parent=1 // loop_footer_branch
      %11 = sbr.rel target = $region3
    $region8: #{patch_embedding.1} parent=1 // loop_exit
      _
    %309 = vsyncpa [#allocation3], 1
    %s310 = scalar_lea.sflag [#allocation3], 1
    %311 = vsyncpa %s310, 1

</llo_original>
